<compile_context>
chip_gen: v5e
topology: v5e:2x2
jax: 0.10.0
libtpu: 0.0.40
codegen_flags: <defaults>
</compile_context>

<pallas_src>
import functools

import jax
import jax.numpy as jnp
from jax.experimental import pallas as pl
from jax.experimental.pallas import tpu as pltpu


def _round_up(n, m):
    return ((n + m - 1) // m) * m


def _network_kernel(x_ref, w_ref, b_ref, out_ref, *, action_size):
    """One batch tile of the full forward pass.

    x_ref  : (bm, D)       padded input block
    w_ref  : (3, D, D)     [W1 | W2 | fused-head W], zero-padded
    b_ref  : (3, 1, D)     [b1 | b2 | fused-head b], zero-padded
    out_ref: (bm, D)       lane-dense fused output (mu | var | value | zero-pad)
    """
    x = x_ref[...]

    # fc1 + ReLU
    h1 = jnp.dot(x, w_ref[0], preferred_element_type=jnp.float32) + b_ref[0]
    h1 = jnp.maximum(h1, 0.0)

    # fc2 + ReLU
    h2 = jnp.dot(h1, w_ref[1], preferred_element_type=jnp.float32) + b_ref[1]
    h2 = jnp.maximum(h2, 0.0)

    # fused heads: single MXU pass, then per-lane activation select
    z = jnp.dot(h2, w_ref[2], preferred_element_type=jnp.float32) + b_ref[2]

    lane = jax.lax.broadcasted_iota(jnp.int32, z.shape, dimension=1)
    mu_part = jnp.tanh(z) * 0.1
    softplus = jnp.maximum(z, 0.0) + jnp.log1p(jnp.exp(-jnp.abs(z)))
    out_ref[...] = jnp.where(
        lane < action_size, mu_part,
        jnp.where(lane < 2 * action_size, softplus, z))


def network_forward(x, params, *, block_batch=128):
    """Run the Network forward pass as a single Pallas TPU kernel.

    x: (B, state_size) float32
    params: dict with W1,b1,W2,b2,Wmu,bmu,Wvar,bvar,Wval,bval
            (weights stored (in, out), biases (1, out))
    returns: (mu, var, value) with shapes (B, A), (B, A), (B, 1)
    """
    B, S = x.shape
    A = params["Wmu"].shape[1]
    H1 = params["W1"].shape[1]
    H2 = params["W2"].shape[1]
    head_out = 2 * A + 1

    # Common padded width: everything lives on a lane-dense (D, D) tile.
    D = _round_up(max(S, H1, H2, head_out, 128), 128)

    def pad_w(w):
        return jnp.zeros((D, D), jnp.float32).at[:w.shape[0], :w.shape[1]].set(w)

    def pad_b(b):
        return jnp.zeros((1, D), jnp.float32).at[:, :b.shape[1]].set(b)

    # Fuse the three heads into one weight / bias.
    w_head = jnp.concatenate([params["Wmu"], params["Wvar"], params["Wval"]], axis=1)
    b_head = jnp.concatenate([params["bmu"], params["bvar"], params["bval"]], axis=1)

    w_slab = jnp.stack([pad_w(params["W1"]), pad_w(params["W2"]), pad_w(w_head)])  # (3, D, D)
    b_slab = jnp.stack([pad_b(params["b1"]), pad_b(params["b2"]), pad_b(b_head)])  # (3, 1, D)
    b_slab = b_slab.reshape(3, 1, D)

    # Batch tiling: grid over batch, weights resident across iterations.
    bm = min(block_batch, _round_up(B, 8))
    Bp = _round_up(B, bm)
    x_p = jnp.zeros((Bp, D), jnp.float32).at[:B, :S].set(x)

    grid = (Bp // bm,)

    out = pl.pallas_call(
        functools.partial(_network_kernel, action_size=A),
        out_shape=jax.ShapeDtypeStruct((Bp, D), jnp.float32),
        grid_spec=pltpu.PrefetchScalarGridSpec(
            num_scalar_prefetch=0,
            grid=grid,
            in_specs=[
                pl.BlockSpec((bm, D), lambda i: (i, 0)),          # x tile
                pl.BlockSpec((3, D, D), lambda i: (0, 0, 0)),     # weights (resident)
                pl.BlockSpec((3, 1, D), lambda i: (0, 0, 0)),     # biases  (resident)
            ],
            out_specs=pl.BlockSpec((bm, D), lambda i: (i, 0)),    # lane-dense fused out
        ),
        compiler_params=pltpu.CompilerParams(
            dimension_semantics=("parallel",)),                   # megacore on v7x
    )(x_p, w_slab, b_slab)

    mu = out[:B, :A]
    var = out[:B, A:2 * A]
    value = out[:B, 2 * A:2 * A + 1]
    return mu, var, value


# ----------------------------- init / reference -----------------------------

def _xavier_uniform(key, fan_in, fan_out):
    # matches torch.nn.init.xavier_uniform_ (gain=1.0), stored as (in, out)
    bound = jnp.sqrt(6.0 / (fan_in + fan_out))
    return jax.random.uniform(key, (fan_in, fan_out), jnp.float32, -bound, bound)


def _bias_init(key, fan_in, fan_out):
    # matches default nn.Linear bias init: U(-1/sqrt(fan_in), 1/sqrt(fan_in))
    bound = 1.0 / jnp.sqrt(jnp.float32(fan_in))
    return jax.random.uniform(key, (1, fan_out), jnp.float32, -bound, bound)


def init_params(key, state_size, action_size, fc1_units=100, fc2_units=100):
    ks = jax.random.split(key, 10)
    return {
        "W1":   _xavier_uniform(ks[0], state_size, fc1_units),
        "b1":   _bias_init(ks[1], state_size, fc1_units),
        "W2":   _xavier_uniform(ks[2], fc1_units, fc2_units),
        "b2":   _bias_init(ks[3], fc1_units, fc2_units),
        "Wmu":  _xavier_uniform(ks[4], fc2_units, action_size),
        "bmu":  _bias_init(ks[5], fc2_units, action_size),
        "Wvar": _xavier_uniform(ks[6], fc2_units, action_size),
        "bvar": _bias_init(ks[7], fc2_units, action_size),
        "Wval": _xavier_uniform(ks[8], fc2_units, 1),
        "bval": _bias_init(ks[9], fc2_units, 1),
    }


def _reference_forward(x, p):
    h1 = jnp.maximum(x @ p["W1"] + p["b1"], 0.0)
    h2 = jnp.maximum(h1 @ p["W2"] + p["b2"], 0.0)
    mu = jnp.tanh(h2 @ p["Wmu"] + p["bmu"]) / 10.0
    var = jax.nn.softplus(h2 @ p["Wvar"] + p["bvar"])
    value = h2 @ p["Wval"] + p["bval"]
    return mu, var, value


if __name__ == "__main__":
    key = jax.random.PRNGKey(0)
    k_param, k_x = jax.random.split(key)

    batch = 8
    state_size = 16
    action_size = 4

    params = init_params(k_param, state_size, action_size)
    x = jax.random.normal(k_x, (batch, state_size), dtype=jnp.float32)

    mu, var, value = network_forward(x, params)
    jax.block_until_ready((mu, var, value))

    # sanity-check against a plain-JAX reference
    mu_r, var_r, val_r = _reference_forward(x, params)
    assert mu.shape == (batch, action_size)
    assert var.shape == (batch, action_size)
    assert value.shape == (batch, 1)
    assert jnp.allclose(mu, mu_r, atol=1e-5)
    assert jnp.allclose(var, var_r, atol=1e-5)
    assert jnp.allclose(value, val_r, atol=1e-5)

    print("KERNEL_OK")
</pallas_src>

<mosaic_0001>
module attributes {stable_mosaic.version = 11 : i64} {
  func.func @_network_kernel(%arg0: i32, %arg1: memref<8x128xf32, #tpu.memory_space<vmem>>, %arg2: memref<3x128x128xf32, #tpu.memory_space<vmem>>, %arg3: memref<3x1x128xf32, #tpu.memory_space<vmem>>, %arg4: memref<8x128xf32, #tpu.memory_space<vmem>>) attributes {dimension_semantics = [#tpu.dimension_semantics<parallel>], iteration_bounds = array<i64: 1>, scalar_prefetch = 0 : i64, scratch_operands = 0 : i64, tpu.core_type = #tpu.core_type<tc>, window_params = [{transform_indices = @transform_0, window_bounds = array<i64: 8, 128>}, {pipeline_mode = #tpu.pipeline_mode<synchronous>, transform_indices = @transform_1, window_bounds = array<i64: 3, 128, 128>}, {pipeline_mode = #tpu.pipeline_mode<synchronous>, transform_indices = @transform_2, window_bounds = array<i64: 3, 1, 128>}, {transform_indices = @transform_3, window_bounds = array<i64: 8, 128>}]} {
    %c0 = arith.constant 0 : index
    %c0_0 = arith.constant 0 : index
    %0 = vector.load %arg1[%c0, %c0_0] : memref<8x128xf32, #tpu.memory_space<vmem>>, vector<8x128xf32>
    %c0_1 = arith.constant 0 : index
    %c0_2 = arith.constant 0 : index
    %c0_3 = arith.constant 0 : index
    %1 = vector.load %arg2[%c0_1, %c0_2, %c0_3] : memref<3x128x128xf32, #tpu.memory_space<vmem>>, vector<1x128x128xf32>
    %2 = vector.shape_cast %1 : vector<1x128x128xf32> to vector<128x128xf32>
    %cst = arith.constant dense<0.000000e+00> : vector<8x128xf32>
    %3 = tpu.matmul %0, %2, %cst {dimension_numbers = #tpu.dot_dimension_numbers<[1], [0], [0], [1], [0, 0, 1, 1], [], []>} : vector<8x128xf32>, vector<128x128xf32>, vector<8x128xf32> -> vector<8x128xf32>
    %c0_4 = arith.constant 0 : index
    %c0_5 = arith.constant 0 : index
    %c0_6 = arith.constant 0 : index
    %4 = vector.load %arg3[%c0_4, %c0_5, %c0_6] : memref<3x1x128xf32, #tpu.memory_space<vmem>>, vector<1x1x128xf32>
    %5 = vector.shape_cast %4 : vector<1x1x128xf32> to vector<1x128xf32>
    %6 = vector.broadcast %5 : vector<1x128xf32> to vector<8x128xf32>
    %7 = arith.addf %3, %6 : vector<8x128xf32>
    %cst_7 = arith.constant 0.000000e+00 : f32
    %8 = vector.broadcast %cst_7 : f32 to vector<8x128xf32>
    %9 = arith.maximumf %7, %8 : vector<8x128xf32>
    %c1 = arith.constant 1 : index
    %c0_8 = arith.constant 0 : index
    %c0_9 = arith.constant 0 : index
    %10 = vector.load %arg2[%c1, %c0_8, %c0_9] : memref<3x128x128xf32, #tpu.memory_space<vmem>>, vector<1x128x128xf32>
    %11 = vector.shape_cast %10 : vector<1x128x128xf32> to vector<128x128xf32>
    %cst_10 = arith.constant dense<0.000000e+00> : vector<8x128xf32>
    %12 = tpu.matmul %9, %11, %cst_10 {dimension_numbers = #tpu.dot_dimension_numbers<[1], [0], [0], [1], [0, 0, 1, 1], [], []>} : vector<8x128xf32>, vector<128x128xf32>, vector<8x128xf32> -> vector<8x128xf32>
    %c1_11 = arith.constant 1 : index
    %c0_12 = arith.constant 0 : index
    %c0_13 = arith.constant 0 : index
    %13 = vector.load %arg3[%c1_11, %c0_12, %c0_13] : memref<3x1x128xf32, #tpu.memory_space<vmem>>, vector<1x1x128xf32>
    %14 = vector.shape_cast %13 : vector<1x1x128xf32> to vector<1x128xf32>
    %15 = vector.broadcast %14 : vector<1x128xf32> to vector<8x128xf32>
    %16 = arith.addf %12, %15 : vector<8x128xf32>
    %cst_14 = arith.constant 0.000000e+00 : f32
    %17 = vector.broadcast %cst_14 : f32 to vector<8x128xf32>
    %18 = arith.maximumf %16, %17 : vector<8x128xf32>
    %c2 = arith.constant 2 : index
    %c0_15 = arith.constant 0 : index
    %c0_16 = arith.constant 0 : index
    %19 = vector.load %arg2[%c2, %c0_15, %c0_16] : memref<3x128x128xf32, #tpu.memory_space<vmem>>, vector<1x128x128xf32>
    %20 = vector.shape_cast %19 : vector<1x128x128xf32> to vector<128x128xf32>
    %cst_17 = arith.constant dense<0.000000e+00> : vector<8x128xf32>
    %21 = tpu.matmul %18, %20, %cst_17 {dimension_numbers = #tpu.dot_dimension_numbers<[1], [0], [0], [1], [0, 0, 1, 1], [], []>} : vector<8x128xf32>, vector<128x128xf32>, vector<8x128xf32> -> vector<8x128xf32>
    %c2_18 = arith.constant 2 : index
    %c0_19 = arith.constant 0 : index
    %c0_20 = arith.constant 0 : index
    %22 = vector.load %arg3[%c2_18, %c0_19, %c0_20] : memref<3x1x128xf32, #tpu.memory_space<vmem>>, vector<1x1x128xf32>
    %23 = vector.shape_cast %22 : vector<1x1x128xf32> to vector<1x128xf32>
    %24 = vector.broadcast %23 : vector<1x128xf32> to vector<8x128xf32>
    %25 = arith.addf %21, %24 : vector<8x128xf32>
    %26 = tpu.iota {dimensions = array<i32: 1>} : vector<8x128xi32>
    %27 = math.tanh %25 : vector<8x128xf32>
    %cst_21 = arith.constant 1.000000e-01 : f32
    %28 = vector.broadcast %cst_21 : f32 to vector<8x128xf32>
    %29 = arith.mulf %27, %28 : vector<8x128xf32>
    %cst_22 = arith.constant 0.000000e+00 : f32
    %30 = vector.broadcast %cst_22 : f32 to vector<8x128xf32>
    %31 = arith.maximumf %25, %30 : vector<8x128xf32>
    %32 = math.absf %25 : vector<8x128xf32>
    %cst_23 = arith.constant 0.000000e+00 : f32
    %33 = vector.broadcast %cst_23 : f32 to vector<8x128xf32>
    %34 = arith.subf %33, %32 : vector<8x128xf32>
    %35 = math.exp %34 : vector<8x128xf32>
    %36 = math.log1p %35 : vector<8x128xf32>
    %37 = arith.addf %31, %36 : vector<8x128xf32>
    %c4_i32 = arith.constant 4 : i32
    %38 = vector.broadcast %c4_i32 : i32 to vector<8x128xi32>
    %39 = arith.cmpi slt, %26, %38 : vector<8x128xi32>
    %c8_i32 = arith.constant 8 : i32
    %40 = vector.broadcast %c8_i32 : i32 to vector<8x128xi32>
    %41 = arith.cmpi slt, %26, %40 : vector<8x128xi32>
    %42 = arith.select %41, %37, %25 : vector<8x128xi1>, vector<8x128xf32>
    %43 = arith.select %39, %29, %42 : vector<8x128xi1>, vector<8x128xf32>
    %c0_24 = arith.constant 0 : index
    %c0_25 = arith.constant 0 : index
    %44 = vector.load %arg4[%c0_24, %c0_25] : memref<8x128xf32, #tpu.memory_space<vmem>>, vector<8x128xf32>
    tpu.vector_store %arg4[%c0_24, %c0_25], %43 {strides = array<i32>} : memref<8x128xf32, #tpu.memory_space<vmem>>, vector<8x128xf32>,
    return
  }
  func.func @transform_0(%arg0: i32) -> (i32, i32) {
    %c0_i32 = arith.constant 0 : i32
    %c0_i32_0 = arith.constant 0 : i32
    return %arg0, %c0_i32 : i32, i32
  }
  func.func @transform_1(%arg0: i32) -> (i32, i32, i32) {
    %c0_i32 = arith.constant 0 : i32
    %c0_i32_0 = arith.constant 0 : i32
    %c0_i32_1 = arith.constant 0 : i32
    %c0_i32_2 = arith.constant 0 : i32
    return %c0_i32, %c0_i32_0, %c0_i32_1 : i32, i32, i32
  }
  func.func @transform_2(%arg0: i32) -> (i32, i32, i32) {
    %c0_i32 = arith.constant 0 : i32
    %c0_i32_0 = arith.constant 0 : i32
    %c0_i32_1 = arith.constant 0 : i32
    %c0_i32_2 = arith.constant 0 : i32
    return %c0_i32, %c0_i32_0, %c0_i32_1 : i32, i32, i32
  }
  func.func @transform_3(%arg0: i32) -> (i32, i32) {
    %c0_i32 = arith.constant 0 : i32
    %c0_i32_0 = arith.constant 0 : i32
    return %arg0, %c0_i32 : i32, i32
  }
}

</mosaic_0001>

<llo_original>
// kernel: tpu_custom_call.1
$region0: #{tpu_custom_call.1}
  #allocation0 [shape = 'u32[]', space=smem, size = 0x4, offset = 0x4, fixed_abs, tag = 'smem constant byte address 0x4 - core index']
  #allocation1 [shape = 'u32[72,128]{1,0:T(1,128)}', space=vmem, size = 0x9000, scoped, tag = 'internal scratch']
  %s0 = inlined_call_operand.hbm [shape: f32[8,128], index: 0, kind: input, shape index: {}]
  %s1 = inlined_call_operand.hbm [shape: f32[3,128,128], index: 1, kind: input, shape index: {}]
  %s2 = inlined_call_operand.hbm [shape: f32[3,1,128], index: 2, kind: input, shape index: {}]
  %s3 = inlined_call_operand.hbm [shape: f32[8,128], index: 3, kind: output, shape index: {}]
  %s4 = sld [smem:[#allocation0]]
  $region34: #{tpu_custom_call.1} parent=0
    _
  %s6 = ssub.s32 1, %s4
  %s7 = scalar_select 0, %s6, %s4
  $region1: #{tpu_custom_call.1} parent=0
    #allocation2 [shape = 'u8[4096]{0}', space=vmem, size = 0x1000, scoped, tag = 'input window, operand 0, single buffered']
    #allocation3 [shape = 's32[1]{0}', space=sflag, size = 0x4, scoped, tag = 'scoped memory for tpu_custom_call.1']
    #allocation4 [shape = 's32[1]{0}', space=sflag, size = 0x4, scoped, tag = 'scoped memory for tpu_custom_call.1']
    #allocation5 [shape = 'u8[196608]{0}', space=vmem, size = 0x30000, scoped, tag = 'input window, operand 1, single buffered']
    #allocation6 [shape = 's32[1]{0}', space=sflag, size = 0x4, scoped, tag = 'scoped memory for tpu_custom_call.1']
    #allocation7 [shape = 'u8[1536]{0}', space=vmem, size = 0x800, scoped, tag = 'input window, operand 2, single buffered']
    #allocation8 [shape = 'u8[4096]{0}', space=vmem, size = 0x1000, scoped, tag = 'output window, operand 0, single buffered']
    %8 = vsyncpa [#allocation3], 0
    %9 = vsyncpa [#allocation6], 0
    %10 = vsyncpa [#allocation4], 0
    // Predicated region
    $region2: #{tpu_custom_call.1} parent=1 // pred_check
      _
    $region3: #{tpu_custom_call.1} parent=1 // pred_check_branch
      %12 = sbr.rel (0) target = $region5
    $region4: #{tpu_custom_call.1} parent=1 // pred_region
      %14 = vsyncadd [#allocation3], 0
      %s16 = sshll.u32 %s0, 4
      %s17 = int_to_ptr.hbm [resolvable:$true] %s16
      %s18 = sshll.u32 [#allocation2], 4
      %s19 = int_to_ptr.vmem [resolvable:$true] %s18
      %21 = dma.hbm_to_vmem [thread:$0]  %s17, 128, %s19, [#allocation3]
    $region5: #{tpu_custom_call.1} parent=1 // pred_fallthru
      _
    // Predicated region
    $region6: #{tpu_custom_call.1} parent=1 // pred_check
      _
    $region7: #{tpu_custom_call.1} parent=1 // pred_check_branch
      %23 = sbr.rel (0) target = $region9
    $region8: #{tpu_custom_call.1} parent=1 // pred_region
      %25 = vsyncadd [#allocation6], 0
      %s26 = sshll.u32 %s1, 4
      %s27 = int_to_ptr.hbm [resolvable:$true] %s26
      %s28 = sshll.u32 [#allocation5], 4
      %s29 = int_to_ptr.vmem [resolvable:$true] %s28
      %34 = dma.hbm_to_vmem [thread:$0]  %s27, 6144, %s29, [#allocation6], 128, 128, 8
    $region9: #{tpu_custom_call.1} parent=1 // pred_fallthru
      _
    // Predicated region
    $region10: #{tpu_custom_call.1} parent=1 // pred_check
      _
    $region11: #{tpu_custom_call.1} parent=1 // pred_check_branch
      %36 = sbr.rel (0) target = $region13
    $region12: #{tpu_custom_call.1} parent=1 // pred_region
      %38 = vsyncadd [#allocation6], 0
      %s39 = sshll.u32 %s2, 4
      %s40 = int_to_ptr.hbm [resolvable:$true] %s39
      %s41 = sshll.u32 [#allocation7], 4
      %s42 = int_to_ptr.vmem [resolvable:$true] %s41
      %47 = dma.hbm_to_vmem [thread:$0]  %s40, 48, %s42, [#allocation6], 16, 16, 1
    $region13: #{tpu_custom_call.1} parent=1 // pred_fallthru
      _
    // Predicated region
    $region14: #{tpu_custom_call.1} parent=1 // pred_check
      _
    $region15: #{tpu_custom_call.1} parent=1 // pred_check_branch
      %49 = sbr.rel (0) target = $region17
    $region16: #{tpu_custom_call.1} parent=1 // pred_region
      %51 = dma.done [#allocation3], 128
    $region17: #{tpu_custom_call.1} parent=1 // pred_fallthru
      _
    // Predicated region
    $region18: #{tpu_custom_call.1} parent=1 // pred_check
      _
    $region19: #{tpu_custom_call.1} parent=1 // pred_check_branch
      %53 = sbr.rel (0) target = $region21
    $region20: #{tpu_custom_call.1} parent=1 // pred_region
      %55 = dma.done [#allocation6], 6144
    $region21: #{tpu_custom_call.1} parent=1 // pred_fallthru
      _
    // Predicated region
    $region22: #{tpu_custom_call.1} parent=1 // pred_check
      _
    $region23: #{tpu_custom_call.1} parent=1 // pred_check_branch
      %57 = sbr.rel (0) target = $region25
    $region24: #{tpu_custom_call.1} parent=1 // pred_region
      %59 = dma.done [#allocation6], 48
    $region25: #{tpu_custom_call.1} parent=1 // pred_fallthru
      _
    %v60 = vld [vmem:[#allocation2] sm:$0xff]
    %v61 = vld [vmem:[#allocation5] sm:$0xff]
    %v62 = vld [vmem:[#allocation5 + $0x8] sm:$0xff]
    %v63 = vld [vmem:[#allocation5 + $0x10] sm:$0xff]
    %v64 = vld [vmem:[#allocation5 + $0x18] sm:$0xff]
    %v65 = vld [vmem:[#allocation5 + $0x20] sm:$0xff]
    %v66 = vld [vmem:[#allocation5 + $0x28] sm:$0xff]
    %v67 = vld [vmem:[#allocation5 + $0x30] sm:$0xff]
    %v68 = vld [vmem:[#allocation5 + $0x38] sm:$0xff]
    %v69 = vld [vmem:[#allocation5 + $0x40] sm:$0xff]
    %v70 = vld [vmem:[#allocation5 + $0x48] sm:$0xff]
    %v71 = vld [vmem:[#allocation5 + $0x50] sm:$0xff]
    %v72 = vld [vmem:[#allocation5 + $0x58] sm:$0xff]
    %v73 = vld [vmem:[#allocation5 + $0x60] sm:$0xff]
    %v74 = vld [vmem:[#allocation5 + $0x68] sm:$0xff]
    %v75 = vld [vmem:[#allocation5 + $0x70] sm:$0xff]
    %v76 = vld [vmem:[#allocation5 + $0x78] sm:$0xff]
    %v77 = vld [vmem:[#allocation7] sm:$0x1]
    %v79 = vperm.slane %v77, 0
    %81 = vmatpush.msra.mxu0 %v76
    %82 = vmatpush.msra.mxu0 %v75
    %83 = vmatpush.msra.mxu0 %v74
    %84 = vmatpush.msra.mxu0 %v73
    %85 = vmatpush.msra.mxu0 %v72
    %86 = vmatpush.msra.mxu0 %v71
    %87 = vmatpush.msra.mxu0 %v70
    %88 = vmatpush.msra.mxu0 %v69
    %89 = vmatpush.msra.mxu0 %v68
    %90 = vmatpush.msra.mxu0 %v67
    %91 = vmatpush.msra.mxu0 %v66
    %92 = vmatpush.msra.mxu0 %v65
    %93 = vmatpush.msra.mxu0 %v64
    %94 = vmatpush.msra.mxu0 %v63
    %95 = vmatpush.msra.mxu0 %v62
    %96 = vmatpush.msra.mxu0 %v61
    %97 = vmatmul.f32.gmra.mxu0 %v60
    %v98 = vpop.f32.mrf.mxu0
    %v99 = vadd.f32 %v79, %v98
    %100 = vdwg.mxu0
    %v101 = vmax.f32 %v99, 0.0
    %s102 = scalar_lea.vmem [#allocation5], 128
    %v103 = vld [vmem:[%s102] sm:$0xff]
    %v104 = vld [vmem:[%s102 + $0x8] sm:$0xff]
    %v105 = vld [vmem:[%s102 + $0x10] sm:$0xff]
    %v106 = vld [vmem:[%s102 + $0x18] sm:$0xff]
    %v107 = vld [vmem:[%s102 + $0x20] sm:$0xff]
    %v108 = vld [vmem:[%s102 + $0x28] sm:$0xff]
    %v109 = vld [vmem:[%s102 + $0x30] sm:$0xff]
    %v110 = vld [vmem:[%s102 + $0x38] sm:$0xff]
    %v111 = vld [vmem:[%s102 + $0x40] sm:$0xff]
    %v112 = vld [vmem:[%s102 + $0x48] sm:$0xff]
    %v113 = vld [vmem:[%s102 + $0x50] sm:$0xff]
    %v114 = vld [vmem:[%s102 + $0x58] sm:$0xff]
    %v115 = vld [vmem:[%s102 + $0x60] sm:$0xff]
    %v116 = vld [vmem:[%s102 + $0x68] sm:$0xff]
    %v117 = vld [vmem:[%s102 + $0x70] sm:$0xff]
    %v118 = vld [vmem:[%s102 + $0x78] sm:$0xff]
    %s119 = scalar_lea.vmem [#allocation7], 1
    %v120 = vld [vmem:[%s119] sm:$0x1]
    %v122 = vperm.slane %v120, 0
    %124 = vmatpush.msra.mxu0 %v118
    %125 = vmatpush.msra.mxu0 %v117
    %126 = vmatpush.msra.mxu0 %v116
    %127 = vmatpush.msra.mxu0 %v115
    %128 = vmatpush.msra.mxu0 %v114
    %129 = vmatpush.msra.mxu0 %v113
    %130 = vmatpush.msra.mxu0 %v112
    %131 = vmatpush.msra.mxu0 %v111
    %132 = vmatpush.msra.mxu0 %v110
    %133 = vmatpush.msra.mxu0 %v109
    %134 = vmatpush.msra.mxu0 %v108
    %135 = vmatpush.msra.mxu0 %v107
    %136 = vmatpush.msra.mxu0 %v106
    %137 = vmatpush.msra.mxu0 %v105
    %138 = vmatpush.msra.mxu0 %v104
    %139 = vmatpush.msra.mxu0 %v103
    %140 = vmatmul.f32.gmra.mxu0 %v101
    %v141 = vpop.f32.mrf.mxu0
    %v142 = vadd.f32 %v122, %v141
    %143 = vdwg.mxu0
    %v144 = vmax.f32 %v142, 0.0
    %s145 = scalar_lea.vmem [#allocation5], 256
    %v146 = vld [vmem:[%s145] sm:$0xff]
    %v147 = vld [vmem:[%s145 + $0x8] sm:$0xff]
    %v148 = vld [vmem:[%s145 + $0x10] sm:$0xff]
    %v149 = vld [vmem:[%s145 + $0x18] sm:$0xff]
    %v150 = vld [vmem:[%s145 + $0x20] sm:$0xff]
    %v151 = vld [vmem:[%s145 + $0x28] sm:$0xff]
    %v152 = vld [vmem:[%s145 + $0x30] sm:$0xff]
    %v153 = vld [vmem:[%s145 + $0x38] sm:$0xff]
    %v154 = vld [vmem:[%s145 + $0x40] sm:$0xff]
    %v155 = vld [vmem:[%s145 + $0x48] sm:$0xff]
    %v156 = vld [vmem:[%s145 + $0x50] sm:$0xff]
    %v157 = vld [vmem:[%s145 + $0x58] sm:$0xff]
    %v158 = vld [vmem:[%s145 + $0x60] sm:$0xff]
    %v159 = vld [vmem:[%s145 + $0x68] sm:$0xff]
    %v160 = vld [vmem:[%s145 + $0x70] sm:$0xff]
    %v161 = vld [vmem:[%s145 + $0x78] sm:$0xff]
    %s162 = scalar_lea.vmem [#allocation7], 2
    %v163 = vld [vmem:[%s162] sm:$0x1]
    %v165 = vperm.slane %v163, 0
    %167 = vmatpush.msra.mxu0 %v161
    %168 = vmatpush.msra.mxu0 %v160
    %169 = vmatpush.msra.mxu0 %v159
    %170 = vmatpush.msra.mxu0 %v158
    %171 = vmatpush.msra.mxu0 %v157
    %172 = vmatpush.msra.mxu0 %v156
    %173 = vmatpush.msra.mxu0 %v155
    %174 = vmatpush.msra.mxu0 %v154
    %175 = vmatpush.msra.mxu0 %v153
    %176 = vmatpush.msra.mxu0 %v152
    %177 = vmatpush.msra.mxu0 %v151
    %178 = vmatpush.msra.mxu0 %v150
    %179 = vmatpush.msra.mxu0 %v149
    %180 = vmatpush.msra.mxu0 %v148
    %181 = vmatpush.msra.mxu0 %v147
    %182 = vmatpush.msra.mxu0 %v146
    %183 = vmatmul.f32.gmra.mxu0 %v144
    %v184 = vpop.f32.mrf.mxu0
    %v185 = vadd.f32 %v165, %v184
    %186 = vdwg.mxu0
    %v187 = vlaneseq
    %v188 = vand.u32 %v187, 127
    %v189 = vtanh.pop %v185
    %v190 = vmul.f32 %v189, 0.1
    %v191 = vmax.f32 %v185, 0.0
    %v192 = vand.u32 2147483647, %v185
    %v193 = vsub.f32 0.0, %v192
    %v194 = vmul.f32 %v193, 1.442695
    %v195 = vpow.pop %v194
    %v196 = vadd.f32 %v195, 1.0
    %v197 = vlog2.pop %v196
    %v198 = vmul.f32 %v197, 0.6931472
    %v199 = vmul.f32 -0.5, %v195
    %v200 = vadd.f32 %v199, 1.0
    %v201 = vmul.f32 %v200, %v195
    %v202 = vand.u32 2147483647, %v195
    %vm203 = vcmp.lt.f32.partialorder %v202, 0.0004427343
    %v204 = vsel %vm203, %v201, %v198
    %v205 = vadd.f32 %v191, %v204
    %vm206 = vcmp.lt.s32.totalorder %v188, 4
    %vm207 = vcmp.lt.s32.totalorder %v188, 8
    %v208 = vsel %vm207, %v205, %v185
    %v209 = vsel %vm206, %v190, %v208
    %210 = vst [vmem:[#allocation8] sm:$0xff] %v209
    // Predicated region
    $region26: #{tpu_custom_call.1} parent=1 // pred_check
      _
    $region27: #{tpu_custom_call.1} parent=1 // pred_check_branch
      %212 = sbr.rel (0) target = $region29
    $region28: #{tpu_custom_call.1} parent=1 // pred_region
      %214 = vsyncadd [#allocation4], 0
      %s216 = sshll.u32 [#allocation8], 4
      %s217 = int_to_ptr.vmem [resolvable:$true] %s216
      %s218 = sshll.u32 %s3, 4
      %s219 = int_to_ptr.hbm [resolvable:$true] %s218
      %221 = dma.vmem_to_hbm [thread:$0]  %s217, 128, %s219, [#allocation4]
    $region29: #{tpu_custom_call.1} parent=1 // pred_fallthru
      _
    // Predicated region
    $region30: #{tpu_custom_call.1} parent=1 // pred_check
      _
    $region31: #{tpu_custom_call.1} parent=1 // pred_check_branch
      %223 = sbr.rel (0) target = $region33
    $region32: #{tpu_custom_call.1} parent=1 // pred_region
      %225 = dma.done [#allocation4], 128
    $region33: #{tpu_custom_call.1} parent=1 // pred_fallthru
      _
    %226 = vsyncpa [#allocation3], 1
    %227 = vsyncpa [#allocation6], 1
    %228 = vsyncpa [#allocation4], 1

</llo_original>
